<compile_context>
chip_gen: v7x
topology: tpu7x:2x2x1
jax: 0.10.0
libtpu: 0.0.40
codegen_flags: <defaults>
</compile_context>

<pallas_src>
import functools

import jax
import jax.numpy as jnp
from jax import lax
from jax.experimental import pallas as pl
from jax.experimental.pallas import tpu as pltpu


def _matmul_bn_act_kernel(x_ref, w_ref, scale_ref, shift_ref, o_ref, *, act):
    # x_ref:     (1, k*k*C1, TM)  bf16 im2col slab tile (lanes = output positions)
    # w_ref:     (C2, k*k*C1)     bf16 conv weights (tap-major columns)
    # scale_ref: (C2, 1)          f32 folded BN scale  (gamma / sqrt(var + eps))
    # shift_ref: (C2, 1)          f32 folded BN shift  (beta - mean * scale)
    # o_ref:     (1, C2, TM)
    acc = jnp.dot(w_ref[...], x_ref[0],
                  preferred_element_type=jnp.float32)      # (C2, TM), f32 acc on MXU
    y = acc * scale_ref[...] + shift_ref[...]              # BatchNorm (inference), f32 VPU
    if act:
        y = y * jax.nn.sigmoid(y)                          # SiLU: sigmoid on EUP, mul on VPU
    o_ref[0] = y.astype(o_ref.dtype)                       # lane-dense unmasked store


def _pick_spatial_tile(m):
    # Prefer >=2 lane-aligned (multiple-of-128) spatial tiles so both v7x
    # TensorCores get parallel grid steps even at batch 1, while keeping the
    # per-step VMEM footprint modest. Falls back to the full extent otherwise
    # (full-extent block is always a legal BlockSpec).
    for tm in (1024, 512, 256, 128):
        if m % tm == 0 and m // tm >= 2:
            return tm
    return m


def conv_bn_silu(x_nchw, weight_oihw, gamma, beta, running_mean, running_var,
                 *, stride=1, padding=None, eps=1e-5, act=True):
    """Pallas version of Conv(c1, c2, k, s, p).forward with eval-mode BatchNorm."""
    N, C1, H, W = x_nchw.shape
    C2, C1w, kh_, kw_ = weight_oihw.shape
    assert C1w == C1, "grouped conv (g > 1) not supported"   # TODO(synk): groups
    assert kh_ == kw_, "only square kernels supported"
    k, s = kh_, stride
    p = k // 2 if padding is None else padding               # autopad
    Ho = (H + 2 * p - k) // s + 1
    Wo = (W + 2 * p - k) // s + 1
    M = Ho * Wo
    KK = k * k * C1

    # Cast to bf16 first (halves bytes moved while building the slab), then
    # zero-pad spatial dims; stays channel-major (no NCHW<->NHWC HBM transposes).
    x_pad = jnp.pad(x_nchw.astype(jnp.bfloat16), ((0, 0), (0, 0), (p, p), (p, p)))

    # im2col slab, channel-major: row = (kh*k + kw)*C1 + c1, column = output position.
    # TODO(synk): at large CNN shapes build this slab inside the kernel from a haloed
    # row band (manual DMA) instead of materializing the k*k-duplicated slab in HBM.
    taps = []
    for kh in range(k):
        for kw in range(k):
            taps.append(x_pad[:, :,
                              kh:kh + (Ho - 1) * s + 1:s,
                              kw:kw + (Wo - 1) * s + 1:s])    # (N, C1, Ho, Wo) bf16
    slab = jnp.stack(taps, axis=1).reshape(N, KK, M)

    # Weights OIHW -> (C2, k*k*C1), matching the slab's row order; bf16 for the MXU.
    w2d = jnp.transpose(weight_oihw, (0, 2, 3, 1)).reshape(C2, KK).astype(jnp.bfloat16)

    # Fold BatchNorm (inference) into per-channel scale/shift, kept in f32.
    inv_std = 1.0 / jnp.sqrt(running_var.astype(jnp.float32) + eps)
    scale = gamma.astype(jnp.float32) * inv_std
    shift = beta.astype(jnp.float32) - running_mean.astype(jnp.float32) * scale
    scale = scale.reshape(C2, 1)
    shift = shift.reshape(C2, 1)

    TM = _pick_spatial_tile(M)
    grid = (N, M // TM)

    kernel = functools.partial(_matmul_bn_act_kernel, act=act)

    out_dtype = x_nchw.dtype
    cost = pl.CostEstimate(
        flops=2 * N * C2 * KK * M + 4 * N * C2 * M,
        transcendentals=(N * C2 * M) if act else 0,
        bytes_accessed=(slab.size * 2 + w2d.size * 2
                        + (scale.size + shift.size) * 4
                        + N * C2 * M * jnp.dtype(out_dtype).itemsize),
    )

    out_flat = pl.pallas_call(
        kernel,
        out_shape=jax.ShapeDtypeStruct((N, C2, M), out_dtype),
        grid_spec=pltpu.PrefetchScalarGridSpec(
            num_scalar_prefetch=0,
            grid=grid,
            in_specs=[
                pl.BlockSpec((1, KK, TM), lambda n, m: (n, 0, m)),
                # Grid-invariant operands (weights / BN affine): same block index
                # every step -> DMA'd once, resident in VMEM across the grid.
                pl.BlockSpec((C2, KK), lambda n, m: (0, 0)),
                pl.BlockSpec((C2, 1), lambda n, m: (0, 0)),
                pl.BlockSpec((C2, 1), lambda n, m: (0, 0)),
            ],
            out_specs=pl.BlockSpec((1, C2, TM), lambda n, m: (n, 0, m)),
        ),
        compiler_params=pltpu.CompilerParams(
            dimension_semantics=("parallel", "parallel"),
            vmem_limit_bytes=64 * 1024 * 1024),
        cost_estimate=cost,
    )(slab, w2d, scale, shift)

    # (N, C2, Ho*Wo) -> NCHW; pure metadata reshape, no extra HBM transpose pass.
    return out_flat.reshape(N, C2, Ho, Wo)


def _reference(x, w, gamma, beta, mean, var, *, stride=1, padding=None, eps=1e-5):
    # Matches the kernel's numerics: bf16 conv operands, f32 accumulation/epilogue.
    k = w.shape[-1]
    p = k // 2 if padding is None else padding
    y = lax.conv_general_dilated(
        x.astype(jnp.bfloat16), w.astype(jnp.bfloat16),
        window_strides=(stride, stride), padding=((p, p), (p, p)),
        dimension_numbers=("NCHW", "OIHW", "NCHW"),
        preferred_element_type=jnp.float32)
    scale = gamma / jnp.sqrt(var + eps)
    shift = beta - mean * scale
    y = y * scale[None, :, None, None] + shift[None, :, None, None]
    y = y * jax.nn.sigmoid(y)
    return y.astype(x.dtype)


if __name__ == "__main__":
    # Module config: Conv(c1=4, c2=8, k=3, s=1)  ->  autopad = 1
    N, C1, H, W = 2, 4, 16, 16
    C2, K = 8, 3

    key = jax.random.PRNGKey(0)
    kx, kw, kg, kb, km, kv = jax.random.split(key, 6)

    x = jax.random.normal(kx, (N, C1, H, W), dtype=jnp.float32)
    # Deterministic parameter init (synthetic, not a checkpoint load).
    weight = jax.random.normal(kw, (C2, C1, K, K), dtype=jnp.float32) * (1.0 / (C1 * K * K) ** 0.5)
    gamma = 1.0 + 0.1 * jax.random.normal(kg, (C2,), dtype=jnp.float32)
    beta = 0.1 * jax.random.normal(kb, (C2,), dtype=jnp.float32)
    running_mean = 0.1 * jax.random.normal(km, (C2,), dtype=jnp.float32)
    running_var = 1.0 + 0.1 * jax.random.uniform(kv, (C2,), dtype=jnp.float32)

    out = conv_bn_silu(x, weight, gamma, beta, running_mean, running_var)
    out = jax.block_until_ready(out)

    ref = _reference(x, weight, gamma, beta, running_mean, running_var)
    assert out.shape == (N, C2, H, W)
    assert jnp.allclose(out, ref, atol=5e-3, rtol=5e-3), "mismatch vs reference conv+bn+silu"

    print("KERNEL_OK")
</pallas_src>

<mosaic_0001>
module attributes {stable_mosaic.version = 11 : i64} {
  func.func @_matmul_bn_act_kernel(%arg0: i32, %arg1: i32, %arg2: memref<1x36x128xbf16, #tpu.memory_space<vmem>>, %arg3: memref<8x36xbf16, #tpu.memory_space<vmem>>, %arg4: memref<8x1xf32, #tpu.memory_space<vmem>>, %arg5: memref<8x1xf32, #tpu.memory_space<vmem>>, %arg6: memref<1x8x128xf32, #tpu.memory_space<vmem>>) attributes {dimension_semantics = [#tpu.dimension_semantics<parallel>, #tpu.dimension_semantics<parallel>], iteration_bounds = array<i64: 2, 2>, scalar_prefetch = 0 : i64, scratch_operands = 0 : i64, tpu.core_type = #tpu.core_type<tc>, window_params = [{transform_indices = @transform_0, window_bounds = array<i64: 1, 36, 128>}, {pipeline_mode = #tpu.pipeline_mode<synchronous>, transform_indices = @transform_1, window_bounds = array<i64: 8, 36>}, {pipeline_mode = #tpu.pipeline_mode<synchronous>, transform_indices = @transform_2, window_bounds = array<i64: 8, 1>}, {pipeline_mode = #tpu.pipeline_mode<synchronous>, transform_indices = @transform_3, window_bounds = array<i64: 8, 1>}, {transform_indices = @transform_4, window_bounds = array<i64: 1, 8, 128>}]} {
    %c0 = arith.constant 0 : index
    %c0_0 = arith.constant 0 : index
    %0 = vector.load %arg3[%c0, %c0_0] : memref<8x36xbf16, #tpu.memory_space<vmem>>, vector<8x36xbf16>
    %c0_1 = arith.constant 0 : index
    %c0_2 = arith.constant 0 : index
    %c0_3 = arith.constant 0 : index
    %1 = vector.load %arg2[%c0_1, %c0_2, %c0_3] : memref<1x36x128xbf16, #tpu.memory_space<vmem>>, vector<1x36x128xbf16>
    %2 = vector.shape_cast %1 : vector<1x36x128xbf16> to vector<36x128xbf16>
    %cst = arith.constant dense<0.000000e+00> : vector<8x128xf32>
    %3 = tpu.matmul %0, %2, %cst {dimension_numbers = #tpu.dot_dimension_numbers<[1], [0], [0], [1], [0, 0, 1, 1], [], []>} : vector<8x36xbf16>, vector<36x128xbf16>, vector<8x128xf32> -> vector<8x128xf32>
    %c0_4 = arith.constant 0 : index
    %c0_5 = arith.constant 0 : index
    %4 = vector.load %arg4[%c0_4, %c0_5] : memref<8x1xf32, #tpu.memory_space<vmem>>, vector<8x1xf32>
    %5 = vector.broadcast %4 : vector<8x1xf32> to vector<8x128xf32>
    %6 = arith.mulf %3, %5 : vector<8x128xf32>
    %c0_6 = arith.constant 0 : index
    %c0_7 = arith.constant 0 : index
    %7 = vector.load %arg5[%c0_6, %c0_7] : memref<8x1xf32, #tpu.memory_space<vmem>>, vector<8x1xf32>
    %8 = vector.broadcast %7 : vector<8x1xf32> to vector<8x128xf32>
    %9 = arith.addf %6, %8 : vector<8x128xf32>
    %10 = arith.negf %9 : vector<8x128xf32>
    %11 = math.exp %10 : vector<8x128xf32>
    %cst_8 = arith.constant 1.000000e+00 : f32
    %12 = vector.broadcast %cst_8 : f32 to vector<8x128xf32>
    %13 = arith.addf %12, %11 : vector<8x128xf32>
    %14 = arith.divf %12, %13 : vector<8x128xf32>
    %15 = arith.mulf %9, %14 : vector<8x128xf32>
    %c0_9 = arith.constant 0 : index
    %c0_10 = arith.constant 0 : index
    %c0_11 = arith.constant 0 : index
    %16 = vector.load %arg6[%c0_9, %c0_10, %c0_11] : memref<1x8x128xf32, #tpu.memory_space<vmem>>, vector<1x8x128xf32>
    %17 = vector.shape_cast %16 : vector<1x8x128xf32> to vector<8x128xf32>
    %18 = vector.shape_cast %15 : vector<8x128xf32> to vector<1x8x128xf32>
    tpu.vector_store %arg6[%c0_9, %c0_10, %c0_11], %18 {strides = array<i32>} : memref<1x8x128xf32, #tpu.memory_space<vmem>>, vector<1x8x128xf32>,
    return
  }
  func.func @transform_0(%arg0: i32, %arg1: i32) -> (i32, i32, i32) {
    %c0_i32 = arith.constant 0 : i32
    %c0_i32_0 = arith.constant 0 : i32
    return %arg0, %c0_i32, %arg1 : i32, i32, i32
  }
  func.func @transform_1(%arg0: i32, %arg1: i32) -> (i32, i32) {
    %c0_i32 = arith.constant 0 : i32
    %c0_i32_0 = arith.constant 0 : i32
    %c0_i32_1 = arith.constant 0 : i32
    return %c0_i32, %c0_i32_0 : i32, i32
  }
  func.func @transform_2(%arg0: i32, %arg1: i32) -> (i32, i32) {
    %c0_i32 = arith.constant 0 : i32
    %c0_i32_0 = arith.constant 0 : i32
    %c0_i32_1 = arith.constant 0 : i32
    return %c0_i32, %c0_i32_0 : i32, i32
  }
  func.func @transform_3(%arg0: i32, %arg1: i32) -> (i32, i32) {
    %c0_i32 = arith.constant 0 : i32
    %c0_i32_0 = arith.constant 0 : i32
    %c0_i32_1 = arith.constant 0 : i32
    return %c0_i32, %c0_i32_0 : i32, i32
  }
  func.func @transform_4(%arg0: i32, %arg1: i32) -> (i32, i32, i32) {
    %c0_i32 = arith.constant 0 : i32
    %c0_i32_0 = arith.constant 0 : i32
    return %arg0, %c0_i32, %arg1 : i32, i32, i32
  }
}

</mosaic_0001>

<llo_original>
// kernel: tpu_custom_call.1
$region0: #{tpu_custom_call.1}
  #allocation0 [shape = 'u32[]', space=smem, size = 0x4, offset = 0x4, fixed_abs, tag = 'smem constant byte address 0x4 - core index']
  #allocation1 [shape = 'u32[144,128]{1,0:T(1,128)}', space=vmem, size = 0x12000, scoped, tag = 'internal scratch']
  %s0 = inlined_call_operand.hbm [shape: bf16[2,36,256], index: 0, kind: input, shape index: {}]
  %s1 = inlined_call_operand.hbm [shape: bf16[8,36], index: 1, kind: input, shape index: {}]
  %s2 = inlined_call_operand.hbm [shape: f32[8,1], index: 2, kind: input, shape index: {}]
  %s3 = inlined_call_operand.hbm [shape: f32[8,1], index: 3, kind: input, shape index: {}]
  %s4 = inlined_call_operand.hbm [shape: f32[2,8,256], index: 4, kind: output, shape index: {}]
  %s5 = sld [smem:[#allocation0]]
  $region65: #{tpu_custom_call.1} parent=0
    _
  %s7 = ssub.s32 1, %s5
  %s8 = scalar_select 0, %s7, %s5
  $region1: #{tpu_custom_call.1} parent=0
    #allocation2 [shape = 'u8[20480]{0}', space=vmem, size = 0x5000, scoped, tag = 'input window, operand 0']
    #allocation3 [shape = 's32[2]{0}', space=sflag, size = 0x8, scoped, tag = 'scoped memory for tpu_custom_call.1']
    #allocation4 [shape = 's32[2]{0}', space=sflag, size = 0x8, scoped, tag = 'scoped memory for tpu_custom_call.1']
    #allocation5 [shape = 'u8[2048]{0}', space=vmem, size = 0x800, scoped, tag = 'input window, operand 1, single buffered']
    #allocation6 [shape = 's32[1]{0}', space=sflag, size = 0x4, scoped, tag = 'scoped memory for tpu_custom_call.1']
    #allocation7 [shape = 'u8[4096]{0}', space=vmem, size = 0x1000, scoped, tag = 'input window, operand 2, single buffered']
    #allocation8 [shape = 'u8[4096]{0}', space=vmem, size = 0x1000, scoped, tag = 'input window, operand 3, single buffered']
    #allocation9 [shape = 's32[1]{0}', space=sflag, size = 0x4, scoped, tag = 'scoped memory for tpu_custom_call.1']
    #allocation10 [shape = 'u8[8192]{0}', space=vmem, size = 0x2000, scoped, tag = 'output window, operand 0']
    %9 = vsyncpa [#allocation3], 0
    %s10 = scalar_lea.sflag [#allocation3], 1
    %11 = vsyncpa %s10, 0
    %12 = vsyncpa [#allocation6], 0
    %13 = vsyncpa [#allocation9], 0
    %14 = vsyncpa [#allocation4], 0
    %s15 = scalar_lea.sflag [#allocation4], 1
    %16 = vsyncpa %s15, 0
    loop: start=0, step=1, limit=6
    $region2: #{tpu_custom_call.1} parent=1 // loop_pre_header
      _
    $region3: #{tpu_custom_call.1} parent=1 // loop_header
      %s18 = sphi 0, %s22
      %p19 = scmp.ge.s32.totalorder %s18, 6
      %s25 = sphi 0, %s37
      %s26 = sphi 0, %s33
      %s27 = sphi 0, %s25
      %s28 = sphi 0, %s26
      %s29 = sphi 0, %s27
      %s30 = sphi 0, %s28
      %s42 = sphi 0, %s44
      %s45 = sphi 0, %s42
      %s46 = sphi 0, %s45
      %s62 = sphi 0, %s46
      %s66 = sphi 0, %s66
      %s68 = sphi 0, %s66
      %s69 = sphi 0, %s68
      %s83 = sphi 0, %s69
      %s87 = sphi 0, %s87
      %s89 = sphi 0, %s87
      %s90 = sphi 0, %s89
      %s104 = sphi 0, %s90
      %s108 = sphi 0, %s108
      %s110 = sphi 0, %s108
      %s111 = sphi 0, %s110
      %s125 = sphi 0, %s111
      %s133 = sphi 0, %s135
      %s136 = sphi 0, %s133
      %s137 = sphi 0, %s136
      %s153 = sphi 0, %s137
    $region4: #{tpu_custom_call.1} parent=1 // loop_header_branch
      %21 = sbr.rel (%p19) target = $region8
    $region5: #{tpu_custom_call.1} parent=1 // loop_body
      %s23 = ssub.s32 %s18, 1
      %s24 = ssub.s32 %s18, 2
      %s31 = sadd.s32 1, %s26
      %p32 = scmp.ge.s32.totalorder %s31, 2
      %s33 = scalar_select %p32, 0, %s31
      %s34 = sadd.s32 1, %s25
      %s35 = scalar_select %p32, %s34, %s25
      %p36 = scmp.ge.s32.totalorder %s35, 2
      %s37 = scalar_select %p36, 0, %s35
      %s38 = ssub.s32 %s25, %s37
      %s39 = ssub.s32 %s26, %s33
      %s40 = sor.u32 %s38, %s39
      %p41 = scmp.eq.s32.totalorder %s40, 0
      %s43 = sadd.s32 %s42, 1
      %s44 = scalar_select %p41, %s42, %s43
      %p47 = pneg %p41
      %p48 = scmp.eq.s32.totalorder %s18, 3
      %p49 = por %p47, %p48
      %p50 = scmp.ne.s32.totalorder %s42, %s45
      %p51 = scmp.eq.s32.totalorder %s18, 0
      %p52 = por %p50, %p51
      %p53 = scmp.ne.s32.totalorder %s42, %s45
      %p54 = scmp.eq.s32.totalorder %s23, 3
      %p55 = por %p53, %p54
      %p56 = scmp.ne.s32.totalorder %s45, %s46
      %p57 = scmp.eq.s32.totalorder %s23, 0
      %p58 = por %p56, %p57
      %p59 = scmp.ne.s32.totalorder %s45, %s46
      %p60 = scmp.eq.s32.totalorder %s24, 3
      %p61 = por %p59, %p60
      %p63 = scmp.ne.s32.totalorder %s46, %s62
      %p64 = scmp.eq.s32.totalorder %s24, 0
      %p65 = por %p63, %p64
      %s67 = sadd.s32 %s66, 1
      %p70 = scmp.eq.s32.totalorder %s18, 3
      %p71 = scmp.ne.s32.totalorder %s66, %s68
      %p72 = scmp.eq.s32.totalorder %s18, 0
      %p73 = por %p71, %p72
      %p74 = scmp.ne.s32.totalorder %s66, %s68
      %p75 = scmp.eq.s32.totalorder %s23, 3
      %p76 = por %p74, %p75
      %p77 = scmp.ne.s32.totalorder %s68, %s69
      %p78 = scmp.eq.s32.totalorder %s23, 0
      %p79 = por %p77, %p78
      %p80 = scmp.ne.s32.totalorder %s68, %s69
      %p81 = scmp.eq.s32.totalorder %s24, 3
      %p82 = por %p80, %p81
      %p84 = scmp.ne.s32.totalorder %s69, %s83
      %p85 = scmp.eq.s32.totalorder %s24, 0
      %p86 = por %p84, %p85
      %s88 = sadd.s32 %s87, 1
      %p91 = scmp.eq.s32.totalorder %s18, 3
      %p92 = scmp.ne.s32.totalorder %s87, %s89
      %p93 = scmp.eq.s32.totalorder %s18, 0
      %p94 = por %p92, %p93
      %p95 = scmp.ne.s32.totalorder %s87, %s89
      %p96 = scmp.eq.s32.totalorder %s23, 3
      %p97 = por %p95, %p96
      %p98 = scmp.ne.s32.totalorder %s89, %s90
      %p99 = scmp.eq.s32.totalorder %s23, 0
      %p100 = por %p98, %p99
      %p101 = scmp.ne.s32.totalorder %s89, %s90
      %p102 = scmp.eq.s32.totalorder %s24, 3
      %p103 = por %p101, %p102
      %p105 = scmp.ne.s32.totalorder %s90, %s104
      %p106 = scmp.eq.s32.totalorder %s24, 0
      %p107 = por %p105, %p106
      %s109 = sadd.s32 %s108, 1
      %p112 = scmp.eq.s32.totalorder %s18, 3
      %p113 = scmp.ne.s32.totalorder %s108, %s110
      %p114 = scmp.eq.s32.totalorder %s18, 0
      %p115 = por %p113, %p114
      %p116 = scmp.ne.s32.totalorder %s108, %s110
      %p117 = scmp.eq.s32.totalorder %s23, 3
      %p118 = por %p116, %p117
      %p119 = scmp.ne.s32.totalorder %s110, %s111
      %p120 = scmp.eq.s32.totalorder %s23, 0
      %p121 = por %p119, %p120
      %p122 = scmp.ne.s32.totalorder %s110, %s111
      %p123 = scmp.eq.s32.totalorder %s24, 3
      %p124 = por %p122, %p123
      %p126 = scmp.ne.s32.totalorder %s111, %s125
      %p127 = scmp.eq.s32.totalorder %s24, 0
      %p128 = por %p126, %p127
      %s129 = ssub.s32 %s25, %s37
      %s130 = ssub.s32 %s26, %s33
      %s131 = sor.u32 %s129, %s130
      %p132 = scmp.eq.s32.totalorder %s131, 0
      %s134 = sadd.s32 %s133, 1
      %s135 = scalar_select %p132, %s133, %s134
      %p138 = pneg %p132
      %p139 = scmp.eq.s32.totalorder %s18, 3
      %p140 = por %p138, %p139
      %p141 = scmp.ne.s32.totalorder %s133, %s136
      %p142 = scmp.eq.s32.totalorder %s18, 0
      %p143 = por %p141, %p142
      %p144 = scmp.ne.s32.totalorder %s133, %s136
      %p145 = scmp.eq.s32.totalorder %s23, 3
      %p146 = por %p144, %p145
      %p147 = scmp.ne.s32.totalorder %s136, %s137
      %p148 = scmp.eq.s32.totalorder %s23, 0
      %p149 = por %p147, %p148
      %p150 = scmp.ne.s32.totalorder %s136, %s137
      %p151 = scmp.eq.s32.totalorder %s24, 3
      %p152 = por %p150, %p151
      %p154 = scmp.ne.s32.totalorder %s137, %s153
      %p155 = scmp.eq.s32.totalorder %s24, 0
      %p156 = por %p154, %p155
      %p157 = scmp.le.s32.totalorder 1, %s18
      %p158 = scmp.lt.s32.totalorder %s18, 5
      %p159 = pnand %p157, %p158
      %p160 = pneg %p159
      // Predicated region
      $region9: #{tpu_custom_call.1} parent=5 // pred_check
        _
      $region10: #{tpu_custom_call.1} parent=5 // pred_check_branch
        %162 = sbr.rel (%p159) target = $region12
      $region11: #{tpu_custom_call.1} parent=5 // pred_region
        %s163 = ssub.s32 %s18, 1
        // Predicated region
        $region13: #{tpu_custom_call.1} parent=11 // pred_check
          %p164 = pneg %p79
        $region14: #{tpu_custom_call.1} parent=11 // pred_check_branch
          %166 = sbr.rel (%p164) target = $region16
        $region15: #{tpu_custom_call.1} parent=11 // pred_region
          %s168 = ssub.s32 64, 64
          %169 = vsyncadd [#allocation6], %s168
          %s171 = sshll.u32 [#allocation5], 4
          %s172 = int_to_ptr.vmem [resolvable:$true] %s171
          %174 = dma.hbm_to_vmem [thread:$0]  %s1, 64, %s172, [#allocation6]
        $region16: #{tpu_custom_call.1} parent=11 // pred_fallthru
          _
        // Predicated region
        $region17: #{tpu_custom_call.1} parent=11 // pred_check
          %p175 = pneg %p100
        $region18: #{tpu_custom_call.1} parent=11 // pred_check_branch
          %177 = sbr.rel (%p175) target = $region20
        $region19: #{tpu_custom_call.1} parent=11 // pred_region
          %s179 = ssub.s32 128, 128
          %180 = vsyncadd [#allocation6], %s179
          %s182 = sshll.u32 [#allocation7], 4
          %s183 = int_to_ptr.vmem [resolvable:$true] %s182
          %185 = dma.hbm_to_vmem [thread:$0]  %s2, 128, %s183, [#allocation6]
        $region20: #{tpu_custom_call.1} parent=11 // pred_fallthru
          _
        // Predicated region
        $region21: #{tpu_custom_call.1} parent=11 // pred_check
          %p186 = pneg %p121
        $region22: #{tpu_custom_call.1} parent=11 // pred_check_branch
          %188 = sbr.rel (%p186) target = $region24
        $region23: #{tpu_custom_call.1} parent=11 // pred_region
          %s190 = ssub.s32 128, 128
          %191 = vsyncadd [#allocation9], %s190
          %s193 = sshll.u32 [#allocation8], 4
          %s194 = int_to_ptr.vmem [resolvable:$true] %s193
          %196 = dma.hbm_to_vmem [thread:$0]  %s3, 128, %s194, [#allocation9]
        $region24: #{tpu_custom_call.1} parent=11 // pred_fallthru
          _
      $region12: #{tpu_custom_call.1} parent=5 // pred_fallthru
        _
      %p197 = scmp.lt.s32.totalorder %s18, 4
      // Predicated region
      $region25: #{tpu_custom_call.1} parent=5 // pred_check
        %p198 = pneg %p197
      $region26: #{tpu_custom_call.1} parent=5 // pred_check_branch
        %200 = sbr.rel (%p198) target = $region28
      $region27: #{tpu_custom_call.1} parent=5 // pred_region
        // Predicated region
        $region29: #{tpu_custom_call.1} parent=27 // pred_check
          %p201 = pneg %p52
        $region30: #{tpu_custom_call.1} parent=27 // pred_check_branch
          %203 = sbr.rel (%p201) target = $region32
        $region31: #{tpu_custom_call.1} parent=27 // pred_region
          %s204 = sand.u32 %s42, 1
          %s205 = scalar_lea.sflag [#allocation3], %s204
          %s206 = sand.u32 %s42, 1
          %s207 = smul.addr %s206, 20
          %s208 = scalar_lea.vmem [#allocation2], %s207
          %s210 = ssub.s32 320, 320
          %211 = vsyncadd %s205, %s210
          %s212 = smul.addr %s25, 10
          %s213 = sadd.s32 %s26, %s212
          %s214 = smul.addr %s213, 64
          %s215 = scalar_lea.hbm %s0, %s214
          %s216 = sshll.u32 %s208, 4
          %s217 = int_to_ptr.vmem [resolvable:$true] %s216
          %222 = dma.hbm_to_vmem [thread:$0]  %s215, 320, %s217, %s205, 128, 64, 4
        $region32: #{tpu_custom_call.1} parent=27 // pred_fallthru
          _
      $region28: #{tpu_custom_call.1} parent=5 // pred_fallthru
        _
      %p223 = scmp.le.s32.totalorder 1, %s18
      %p224 = scmp.lt.s32.totalorder %s18, 5
      %p225 = pnand %p223, %p224
      %p226 = pneg %p225
      // Predicated region
      $region33: #{tpu_custom_call.1} parent=5 // pred_check
        _
      $region34: #{tpu_custom_call.1} parent=5 // pred_check_branch
        %228 = sbr.rel (%p225) target = $region36
      $region35: #{tpu_custom_call.1} parent=5 // pred_region
        %s229 = ssub.s32 %s18, 1
        %s230 = sand.u32 %s45, 1
        %s231 = scalar_lea.sflag [#allocation3], %s230
        %s232 = sand.u32 %s45, 1
        %s233 = smul.addr %s232, 20
        %s234 = scalar_lea.vmem [#allocation2], %s233
        // Predicated region
        $region37: #{tpu_custom_call.1} parent=35 // pred_check
          %p235 = pneg %p58
        $region38: #{tpu_custom_call.1} parent=35 // pred_check_branch
          %237 = sbr.rel (%p235) target = $region40
        $region39: #{tpu_custom_call.1} parent=35 // pred_region
          %238 = dma.done %s231, 320
        $region40: #{tpu_custom_call.1} parent=35 // pred_fallthru
          _
        // Predicated region
        $region41: #{tpu_custom_call.1} parent=35 // pred_check
          %p239 = pneg %p79
        $region42: #{tpu_custom_call.1} parent=35 // pred_check_branch
          %241 = sbr.rel (%p239) target = $region44
        $region43: #{tpu_custom_call.1} parent=35 // pred_region
          %242 = dma.done [#allocation6], 64
        $region44: #{tpu_custom_call.1} parent=35 // pred_fallthru
          _
        // Predicated region
        $region45: #{tpu_custom_call.1} parent=35 // pred_check
          %p243 = pneg %p100
        $region46: #{tpu_custom_call.1} parent=35 // pred_check_branch
          %245 = sbr.rel (%p243) target = $region48
        $region47: #{tpu_custom_call.1} parent=35 // pred_region
          %246 = dma.done [#allocation6], 128
        $region48: #{tpu_custom_call.1} parent=35 // pred_fallthru
          _
        // Predicated region
        $region49: #{tpu_custom_call.1} parent=35 // pred_check
          %p247 = pneg %p121
        $region50: #{tpu_custom_call.1} parent=35 // pred_check_branch
          %249 = sbr.rel (%p247) target = $region52
        $region51: #{tpu_custom_call.1} parent=35 // pred_region
          %250 = dma.done [#allocation9], 128
        $region52: #{tpu_custom_call.1} parent=35 // pred_fallthru
          _
        %s251 = sand.u32 %s45, 1
        %s252 = scalar_lea.sflag [#allocation3], %s251
        %s253 = sand.u32 %s45, 1
        %s254 = smul.addr %s253, 20
        %s255 = scalar_lea.vmem [#allocation2], %s254
        %p256 = pneg %p58
        %p257 = pneg %p55
        %p258 = pneg %p79
        %p259 = pneg %p76
        %p260 = pneg %p100
        %p261 = pneg %p97
        %p262 = pneg %p121
        %p263 = pneg %p118
        %p264 = pneg %p149
        %p265 = pneg %p146
        %s266 = sand.u32 %s136, 1
        %s267 = scalar_lea.sflag [#allocation4], %s266
        %s268 = sand.u32 %s136, 1
        %s269 = smul.addr %s268, 8
        %s270 = scalar_lea.vmem [#allocation10], %s269
        %v272 = vld [vmem:[#allocation5] sm:$0xf]
        %v273 = vld [vmem:[%s234] sm:$0xf]
        %v274 = vld [vmem:[%s234 + $0x4] sm:$0xf]
        %v275 = vld [vmem:[%s234 + $0x8] sm:$0xf]
        %v276 = vld [vmem:[%s234 + $0xc] sm:$0xf]
        %v277 = vld [vmem:[%s234 + $0x10] sm:$0x3]
        %v283 = vunpack.c.l.b16 %v273
        %v284 = vunpack.c.l.b16 %v274
        %v285 = vunpack.c.l.b16 %v275
        %v286 = vunpack.c.l.b16 %v276
        %v287 = vunpack.c.l.b16 %v277
        %v288 = vpack.c.b16 %v284, %v283
        %v289 = vpack.c.b16 %v286, %v285
        %v290 = vpack.c.b16 %v287, %v287
        %vm293 = vcmask 293888
        %v295 = vsel %vm293, %v272, 0
        %vm297 = vcmask 1041408
        %v299 = vsel %vm297, %v290, 0
        %301 = vmatprep.subr.bf16.mxu0 0
        %302 = vmatpush1.bf16.msra.mxu0 %v288
        %303 = vmatprep.subr.bf16.mxu0 0
        %304 = vmatpush1.bf16.msra.mxu0 %v289
        %305 = vmatprep.subr.bf16.mxu0 0
        %306 = vmatpush1.bf16.msra.mxu0 %v299
        %307 = vmatprep.subr.bf16.mxu0 0
        %308 = vmatpush1.bf16.msra.mxu0 0
        %309 = vmatprep.subr.bf16.mxu0 0
        %310 = vmatpush1.bf16.msra.mxu0 0
        %311 = vmatprep.subr.bf16.mxu0 0
        %312 = vmatpush1.bf16.msra.mxu0 0
        %313 = vmatprep.subr.bf16.mxu0 0
        %314 = vmatpush1.bf16.msra.mxu0 0
        %315 = vmatprep.subr.bf16.mxu0 0
        %316 = vmatpush1.bf16.msra.mxu0 0
        %317 = vmatprep.subr.bf16.mxu0 0
        %318 = vmatpush1.bf16.msra.mxu0 0
        %319 = vmatprep.subr.bf16.mxu0 0
        %320 = vmatpush1.bf16.msra.mxu0 0
        %321 = vmatprep.subr.bf16.mxu0 0
        %322 = vmatpush1.bf16.msra.mxu0 0
        %323 = vmatprep.subr.bf16.mxu0 0
        %324 = vmatpush1.bf16.msra.mxu0 0
        %325 = vmatprep.subr.bf16.mxu0 0
        %326 = vmatpush1.bf16.msra.mxu0 0
        %327 = vmatprep.subr.bf16.mxu0 0
        %328 = vmatpush1.bf16.msra.mxu0 0
        %329 = vmatprep.subr.bf16.mxu0 0
        %330 = vmatpush1.bf16.msra.mxu0 0
        %331 = vmatprep.subr.bf16.mxu0 0
        %332 = vmatpush1.bf16.msra.mxu0 0
        %333 = vmatprep.mubr.bf16.mxu0 0
        %334 = vmatmul.mubr.bf16.gmra.mrb[0].mxu0 %v295
        %v335 = vpop.f32.mrb[0].mxu0
        %v336 = vadd.f32 0.0, %v335
        %v337 = vpop.f32.mrb[0].mxu0
        %v338 = vpop.f32.mrb[0].mxu0
        %v339 = vpop.f32.mrb[0].mxu0
        %340 = vdwg.mxu0
        %v341 = vld [vmem:[#allocation7] sm:$0xff]
        %343 = vset.pattern.permute.xlu0 0
        %344 = vperm.xlu0 %343, %v341
        %v345 = vpop.permute.xlu0 %344
        %v347 = vmul.f32 %v336, %v345
        %v348 = vld [vmem:[#allocation8] sm:$0xff]
        %350 = vset.pattern.permute.xlu0 0
        %351 = vperm.xlu0 %350, %v348
        %v352 = vpop.permute.xlu0 %351
        %v354 = vadd.f32 %v347, %v352
        %v355 = vxor.u32 %v354, 2147483648
        %v356 = vmul.f32 %v355, 1.442695
        %v357 = vpow.pop %v356
        %v358 = vadd.f32 %v357, 1.0
        %v359 = vrcp.pop %v358
        %v360 = vmul.f32 1.0, %v359
        %v361 = vmul.f32 %v354, %v360
        %362 = vst [vmem:[%s270] sm:$0xff] %v361
        %s363 = sand.u32 %s136, 1
        %s364 = scalar_lea.sflag [#allocation4], %s363
        %s365 = sand.u32 %s136, 1
        %s366 = smul.addr %s365, 8
        %s367 = scalar_lea.vmem [#allocation10], %s366
        // Predicated region
        $region53: #{tpu_custom_call.1} parent=35 // pred_check
          %p368 = pneg %p146
        $region54: #{tpu_custom_call.1} parent=35 // pred_check_branch
          %370 = sbr.rel (%p368) target = $region56
        $region55: #{tpu_custom_call.1} parent=35 // pred_region
          %s372 = ssub.s32 128, 128
          %373 = vsyncadd %s364, %s372
          %s374 = smul.addr %s27, 2
          %s375 = sadd.s32 %s28, %s374
          %s376 = smul.addr %s375, 128
          %s377 = scalar_lea.hbm %s4, %s376
          %s379 = sshll.u32 %s367, 4
          %s380 = int_to_ptr.vmem [resolvable:$true] %s379
          %382 = dma.vmem_to_hbm [thread:$0]  %s380, 128, %s377, %s364
        $region56: #{tpu_custom_call.1} parent=35 // pred_fallthru
          _
      $region36: #{tpu_custom_call.1} parent=5 // pred_fallthru
        _
      %p383 = scmp.le.s32.totalorder 2, %s18
      // Predicated region
      $region57: #{tpu_custom_call.1} parent=5 // pred_check
        %p384 = pneg %p383
      $region58: #{tpu_custom_call.1} parent=5 // pred_check_branch
        %386 = sbr.rel (%p384) target = $region60
      $region59: #{tpu_custom_call.1} parent=5 // pred_region
        %s387 = ssub.s32 %s18, 2
        // Predicated region
        $region61: #{tpu_custom_call.1} parent=59 // pred_check
          %p388 = pneg %p152
        $region62: #{tpu_custom_call.1} parent=59 // pred_check_branch
          %390 = sbr.rel (%p388) target = $region64
        $region63: #{tpu_custom_call.1} parent=59 // pred_region
          %s391 = sand.u32 %s137, 1
          %s392 = scalar_lea.sflag [#allocation4], %s391
          %s393 = sand.u32 %s137, 1
          %s394 = smul.addr %s393, 8
          %s395 = scalar_lea.vmem [#allocation10], %s394
          %396 = dma.done %s392, 128
        $region64: #{tpu_custom_call.1} parent=59 // pred_fallthru
          _
      $region60: #{tpu_custom_call.1} parent=5 // pred_fallthru
        _
    $region6: #{tpu_custom_call.1} parent=1 // loop_footer
      %s22 = sadd.s32 1, %s18
    $region7: #{tpu_custom_call.1} parent=1 // loop_footer_branch
      %17 = sbr.rel target = $region3
    $region8: #{tpu_custom_call.1} parent=1 // loop_exit
      _
    %397 = vsyncpa [#allocation3], 1
    %s398 = scalar_lea.sflag [#allocation3], 1
    %399 = vsyncpa %s398, 1
    %400 = vsyncpa [#allocation6], 1
    %401 = vsyncpa [#allocation9], 1
    %402 = vsyncpa [#allocation4], 1
    %s403 = scalar_lea.sflag [#allocation4], 1
    %404 = vsyncpa %s403, 1

</llo_original>
